<compile_context>
chip_gen: v5e
topology: v5e:2x2
jax: 0.10.0
libtpu: 0.0.40
codegen_flags: <defaults>
</compile_context>

<pallas_src>
import jax
import jax.numpy as jnp
from jax.experimental import pallas as pl
from jax.experimental.pallas import tpu as pltpu

_LANE = 128
_EPS = 1e-5


def _round_up(n, m):
    return ((n + m - 1) // m) * m


def _leaky_relu(x, slope=0.2):
    # Single VALU max (slope < 1) instead of compare + select.
    return jnp.maximum(x, slope * x)


def _bn_train_onepass(h, gamma, beta, eps=_EPS):
    # Training-mode BatchNorm1d with biased variance, single pass over h:
    # accumulate sum and sum-of-squares, then apply one fused h*scale + shift.
    inv_n = 1.0 / h.shape[0]
    s = jnp.sum(h, axis=0, keepdims=True)
    sq = jnp.sum(h * h, axis=0, keepdims=True)
    mean = s * inv_n
    var = sq * inv_n - mean * mean
    scale = gamma * jax.lax.rsqrt(var + eps)
    shift = beta - mean * scale
    return h * scale + shift


def encd_kernel(x_ref,
                w1_ref, w2_ref, w3_ref, w4_ref,
                vnfc_ref, v512_ref, vout_ref,
                out_ref):
    # Packed per-feature vectors (f32):
    #   vnfc rows: [b1, b2, gamma2, beta2]   (each (1, nfc))
    #   v512 rows: [b3, gamma3, beta3]       (each (1, 512))
    #   vout row : [b4_padded]               ((1, n_out_padded))
    b1 = vnfc_ref[0:1, :]
    b2 = vnfc_ref[1:2, :]
    g2 = vnfc_ref[2:3, :]
    be2 = vnfc_ref[3:4, :]
    b3 = v512_ref[0:1, :]
    g3 = v512_ref[1:2, :]
    be3 = v512_ref[2:3, :]
    b4 = vout_ref[0:1, :]

    # Layer 1: Linear + LeakyReLU (bf16 matmul inputs, f32 accumulation)
    x = x_ref[...].astype(jnp.bfloat16)
    h = jnp.dot(x, w1_ref[...], preferred_element_type=jnp.float32) + b1
    h = _leaky_relu(h)

    # Layer 2: Linear + BatchNorm1d + LeakyReLU
    h = jnp.dot(h.astype(jnp.bfloat16), w2_ref[...],
                preferred_element_type=jnp.float32) + b2
    h = _leaky_relu(_bn_train_onepass(h, g2, be2))

    # Layer 3: Linear + BatchNorm1d + LeakyReLU
    h = jnp.dot(h.astype(jnp.bfloat16), w3_ref[...],
                preferred_element_type=jnp.float32) + b3
    h = _leaky_relu(_bn_train_onepass(h, g3, be3))

    # Layer 4: Linear -> lane-dense (padded) logits
    h = jnp.dot(h.astype(jnp.bfloat16), w4_ref[...],
                preferred_element_type=jnp.float32) + b4
    out_ref[...] = h.astype(out_ref.dtype)


def encd_forward(x, packed_params, n_classes):
    """Run the full EncD MLP inside a single Pallas kernel.

    Everything fits in VMEM, so a single gridless invocation with whole-array
    VMEM blocks is used (block_shape == array shape satisfies tiling rules).
    The output is padded to a multiple of 128 lanes inside the kernel and
    sliced back to n_classes here.
    """
    (w1, w2, w3, w4p, vec_nfc, vec_512, vec_out) = packed_params
    B = x.shape[0]
    n_out_padded = w4p.shape[1]

    operands = (x, w1, w2, w3, w4p, vec_nfc, vec_512, vec_out)
    vmem_spec = pl.BlockSpec(memory_space=pltpu.MemorySpace.VMEM)

    flops = 2 * B * (w1.shape[0] * w1.shape[1]
                     + w2.shape[0] * w2.shape[1]
                     + w3.shape[0] * w3.shape[1]
                     + w4p.shape[0] * w4p.shape[1])
    # rsqrt per feature for the two BatchNorm layers
    transcendentals = w2.shape[1] + w3.shape[1]
    bytes_accessed = sum(int(a.size) * a.dtype.itemsize for a in operands)
    bytes_accessed += B * n_out_padded * 4

    out_padded = pl.pallas_call(
        encd_kernel,
        out_shape=jax.ShapeDtypeStruct((B, n_out_padded), jnp.float32),
        in_specs=[vmem_spec] * len(operands),
        out_specs=vmem_spec,
        compiler_params=pltpu.CompilerParams(
            vmem_limit_bytes=64 * 1024 * 1024),
        cost_estimate=pl.CostEstimate(
            flops=flops,
            transcendentals=transcendentals,
            bytes_accessed=bytes_accessed),
    )(*operands)

    return out_padded[:, :n_classes]


def init_params(key, nlatentdim, nfc, n_classes):
    """Deterministic init mimicking PyTorch nn.Linear default (U[-1/sqrt(fan_in), +])."""
    def linear(key, fan_in, fan_out):
        kw, kb = jax.random.split(key)
        bound = 1.0 / jnp.sqrt(fan_in)
        w = jax.random.uniform(kw, (fan_in, fan_out), jnp.float32, -bound, bound)
        b = jax.random.uniform(kb, (fan_out,), jnp.float32, -bound, bound)
        return w, b

    k1, k2, k3, k4 = jax.random.split(key, 4)
    w1, b1 = linear(k1, nlatentdim, nfc)
    w2, b2 = linear(k2, nfc, nfc)
    w3, b3 = linear(k3, nfc, 512)
    w4, b4 = linear(k4, 512, n_classes)
    # BatchNorm1d init: weight=1, bias=0
    g2 = jnp.ones((nfc,), jnp.float32)
    be2 = jnp.zeros((nfc,), jnp.float32)
    g3 = jnp.ones((512,), jnp.float32)
    be3 = jnp.zeros((512,), jnp.float32)
    return (w1, b1, w2, b2, g2, be2, w3, b3, g3, be3, w4, b4)


def pack_params(raw_params, n_classes):
    """Convert raw f32 params into the kernel's packed, bf16-weight layout."""
    (w1, b1, w2, b2, g2, be2, w3, b3, g3, be3, w4, b4) = raw_params
    nfc = w1.shape[1]
    n_out_padded = _round_up(max(n_classes, 1), _LANE)

    # Lane-pad the final layer so the output store is unmasked / lane-dense.
    w4p = jnp.zeros((w4.shape[0], n_out_padded), jnp.float32).at[:, :n_classes].set(w4)
    b4p = jnp.zeros((n_out_padded,), jnp.float32).at[:n_classes].set(b4)

    # bf16 weights (f32 accumulation happens on the MXU).
    w1b = w1.astype(jnp.bfloat16)
    w2b = w2.astype(jnp.bfloat16)
    w3b = w3.astype(jnp.bfloat16)
    w4b = w4p.astype(jnp.bfloat16)

    # Pack the 8 tiny per-feature vectors into 3 operands.
    vec_nfc = jnp.stack([b1, b2, g2, be2], axis=0).reshape(4, nfc)
    vec_512 = jnp.stack([b3, g3, be3], axis=0).reshape(3, 512)
    vec_out = b4p.reshape(1, n_out_padded)

    return (w1b, w2b, w3b, w4b, vec_nfc, vec_512, vec_out)


def encd_reference(x, packed_params, n_classes):
    """Pure-JAX reference mirroring the kernel's precision scheme."""
    (w1, w2, w3, w4p, vec_nfc, vec_512, vec_out) = packed_params
    b1, b2, g2, be2 = (vec_nfc[i:i + 1, :] for i in range(4))
    b3, g3, be3 = (vec_512[i:i + 1, :] for i in range(3))
    b4 = vec_out[0:1, :]

    h = jnp.dot(x.astype(jnp.bfloat16), w1,
                preferred_element_type=jnp.float32) + b1
    h = _leaky_relu(h)
    h = jnp.dot(h.astype(jnp.bfloat16), w2,
                preferred_element_type=jnp.float32) + b2
    h = _leaky_relu(_bn_train_onepass(h, g2, be2))
    h = jnp.dot(h.astype(jnp.bfloat16), w3,
                preferred_element_type=jnp.float32) + b3
    h = _leaky_relu(_bn_train_onepass(h, g3, be3))
    h = jnp.dot(h.astype(jnp.bfloat16), w4p,
                preferred_element_type=jnp.float32) + b4
    return h[:, :n_classes]


if __name__ == "__main__":
    # Small shapes consistent with the module: nfc shrunk via the kwargs path,
    # the 512-wide layer is hard-coded in the module so it stays 512.
    B = 8            # batch
    NLATENT = 16     # nlatentdim
    NFC = 128        # nfc (kwargs override of default 1024)
    NCLASSES = 8     # nClasses

    key = jax.random.PRNGKey(0)
    kx, kp = jax.random.split(key)
    x = jax.random.normal(kx, (B, NLATENT), jnp.float32)

    raw = init_params(kp, NLATENT, NFC, NCLASSES)
    packed = pack_params(raw, NCLASSES)

    out = encd_forward(x, packed, NCLASSES)
    out = jax.block_until_ready(out)

    ref = encd_reference(x, packed, NCLASSES)
    assert out.shape == (B, NCLASSES)
    assert jnp.allclose(out, ref, atol=1e-2, rtol=1e-2), "mismatch vs reference"

    print("KERNEL_OK")
</pallas_src>

<mosaic_0001>
module attributes {stable_mosaic.version = 11 : i64} {
  func.func @encd_kernel(%arg0: memref<8x16xf32, #tpu.memory_space<vmem>>, %arg1: memref<16x128xbf16, #tpu.memory_space<vmem>>, %arg2: memref<128x128xbf16, #tpu.memory_space<vmem>>, %arg3: memref<128x512xbf16, #tpu.memory_space<vmem>>, %arg4: memref<512x128xbf16, #tpu.memory_space<vmem>>, %arg5: memref<4x128xf32, #tpu.memory_space<vmem>>, %arg6: memref<3x512xf32, #tpu.memory_space<vmem>>, %arg7: memref<1x128xf32, #tpu.memory_space<vmem>>, %arg8: memref<8x128xf32, #tpu.memory_space<vmem>>) attributes {dimension_semantics = [], scalar_prefetch = 0 : i64, scratch_operands = 0 : i64, tpu.core_type = #tpu.core_type<tc>} {
    %c0 = arith.constant 0 : index
    %c0_0 = arith.constant 0 : index
    %0 = vector.load %arg5[%c0, %c0_0] : memref<4x128xf32, #tpu.memory_space<vmem>>, vector<1x128xf32>
    %c1 = arith.constant 1 : index
    %c0_1 = arith.constant 0 : index
    %1 = vector.load %arg5[%c1, %c0_1] : memref<4x128xf32, #tpu.memory_space<vmem>>, vector<1x128xf32>
    %c2 = arith.constant 2 : index
    %c0_2 = arith.constant 0 : index
    %2 = vector.load %arg5[%c2, %c0_2] : memref<4x128xf32, #tpu.memory_space<vmem>>, vector<1x128xf32>
    %c3 = arith.constant 3 : index
    %c0_3 = arith.constant 0 : index
    %3 = vector.load %arg5[%c3, %c0_3] : memref<4x128xf32, #tpu.memory_space<vmem>>, vector<1x128xf32>
    %c0_4 = arith.constant 0 : index
    %c0_5 = arith.constant 0 : index
    %4 = vector.load %arg6[%c0_4, %c0_5] : memref<3x512xf32, #tpu.memory_space<vmem>>, vector<1x512xf32>
    %c1_6 = arith.constant 1 : index
    %c0_7 = arith.constant 0 : index
    %5 = vector.load %arg6[%c1_6, %c0_7] : memref<3x512xf32, #tpu.memory_space<vmem>>, vector<1x512xf32>
    %c2_8 = arith.constant 2 : index
    %c0_9 = arith.constant 0 : index
    %6 = vector.load %arg6[%c2_8, %c0_9] : memref<3x512xf32, #tpu.memory_space<vmem>>, vector<1x512xf32>
    %c0_10 = arith.constant 0 : index
    %c0_11 = arith.constant 0 : index
    %7 = vector.load %arg7[%c0_10, %c0_11] : memref<1x128xf32, #tpu.memory_space<vmem>>, vector<1x128xf32>
    %c0_12 = arith.constant 0 : index
    %c0_13 = arith.constant 0 : index
    %8 = vector.load %arg0[%c0_12, %c0_13] : memref<8x16xf32, #tpu.memory_space<vmem>>, vector<8x16xf32>
    %9 = arith.truncf %8 : vector<8x16xf32> to vector<8x16xbf16>
    %c0_14 = arith.constant 0 : index
    %c0_15 = arith.constant 0 : index
    %10 = vector.load %arg1[%c0_14, %c0_15] : memref<16x128xbf16, #tpu.memory_space<vmem>>, vector<16x128xbf16>
    %cst = arith.constant dense<0.000000e+00> : vector<8x128xf32>
    %11 = tpu.matmul %9, %10, %cst {dimension_numbers = #tpu.dot_dimension_numbers<[1], [0], [0], [1], [0, 0, 1, 1], [], []>} : vector<8x16xbf16>, vector<16x128xbf16>, vector<8x128xf32> -> vector<8x128xf32>
    %12 = vector.broadcast %0 : vector<1x128xf32> to vector<8x128xf32>
    %13 = arith.addf %11, %12 : vector<8x128xf32>
    %cst_16 = arith.constant 2.000000e-01 : f32
    %14 = vector.broadcast %cst_16 : f32 to vector<8x128xf32>
    %15 = arith.mulf %14, %13 : vector<8x128xf32>
    %16 = arith.maximumf %13, %15 : vector<8x128xf32>
    %17 = arith.truncf %16 : vector<8x128xf32> to vector<8x128xbf16>
    %c0_17 = arith.constant 0 : index
    %c0_18 = arith.constant 0 : index
    %18 = vector.load %arg2[%c0_17, %c0_18] : memref<128x128xbf16, #tpu.memory_space<vmem>>, vector<128x128xbf16>
    %cst_19 = arith.constant dense<0.000000e+00> : vector<8x128xf32>
    %19 = tpu.matmul %17, %18, %cst_19 {dimension_numbers = #tpu.dot_dimension_numbers<[1], [0], [0], [1], [0, 0, 1, 1], [], []>} : vector<8x128xbf16>, vector<128x128xbf16>, vector<8x128xf32> -> vector<8x128xf32>
    %20 = vector.broadcast %1 : vector<1x128xf32> to vector<8x128xf32>
    %21 = arith.addf %19, %20 : vector<8x128xf32>
    %cst_20 = arith.constant dense<0.000000e+00> : vector<128xf32>
    %22 = vector.multi_reduction <add>, %21, %cst_20 [0] : vector<8x128xf32> to vector<128xf32>
    %23 = vector.shape_cast %22 : vector<128xf32> to vector<1x128xf32>
    %24 = arith.mulf %21, %21 : vector<8x128xf32>
    %cst_21 = arith.constant dense<0.000000e+00> : vector<128xf32>
    %25 = vector.multi_reduction <add>, %24, %cst_21 [0] : vector<8x128xf32> to vector<128xf32>
    %26 = vector.shape_cast %25 : vector<128xf32> to vector<1x128xf32>
    %cst_22 = arith.constant 1.250000e-01 : f32
    %27 = vector.broadcast %cst_22 : f32 to vector<1x128xf32>
    %28 = arith.mulf %23, %27 : vector<1x128xf32>
    %cst_23 = arith.constant 1.250000e-01 : f32
    %29 = vector.broadcast %cst_23 : f32 to vector<1x128xf32>
    %30 = arith.mulf %26, %29 : vector<1x128xf32>
    %31 = arith.mulf %28, %28 : vector<1x128xf32>
    %32 = arith.subf %30, %31 : vector<1x128xf32>
    %cst_24 = arith.constant 9.99999974E-6 : f32
    %33 = vector.broadcast %cst_24 : f32 to vector<1x128xf32>
    %34 = arith.addf %32, %33 : vector<1x128xf32>
    %35 = math.rsqrt %34 : vector<1x128xf32>
    %36 = arith.mulf %2, %35 : vector<1x128xf32>
    %37 = arith.mulf %28, %36 : vector<1x128xf32>
    %38 = arith.subf %3, %37 : vector<1x128xf32>
    %39 = vector.broadcast %36 : vector<1x128xf32> to vector<8x128xf32>
    %40 = arith.mulf %21, %39 : vector<8x128xf32>
    %41 = vector.broadcast %38 : vector<1x128xf32> to vector<8x128xf32>
    %42 = arith.addf %40, %41 : vector<8x128xf32>
    %cst_25 = arith.constant 2.000000e-01 : f32
    %43 = vector.broadcast %cst_25 : f32 to vector<8x128xf32>
    %44 = arith.mulf %43, %42 : vector<8x128xf32>
    %45 = arith.maximumf %42, %44 : vector<8x128xf32>
    %46 = arith.truncf %45 : vector<8x128xf32> to vector<8x128xbf16>
    %c0_26 = arith.constant 0 : index
    %c0_27 = arith.constant 0 : index
    %47 = vector.load %arg3[%c0_26, %c0_27] : memref<128x512xbf16, #tpu.memory_space<vmem>>, vector<128x512xbf16>
    %cst_28 = arith.constant dense<0.000000e+00> : vector<8x512xf32>
    %48 = tpu.matmul %46, %47, %cst_28 {dimension_numbers = #tpu.dot_dimension_numbers<[1], [0], [0], [1], [0, 0, 1, 1], [], []>} : vector<8x128xbf16>, vector<128x512xbf16>, vector<8x512xf32> -> vector<8x512xf32>
    %49 = vector.broadcast %4 : vector<1x512xf32> to vector<8x512xf32>
    %50 = arith.addf %48, %49 : vector<8x512xf32>
    %cst_29 = arith.constant dense<0.000000e+00> : vector<512xf32>
    %51 = vector.multi_reduction <add>, %50, %cst_29 [0] : vector<8x512xf32> to vector<512xf32>
    %52 = vector.shape_cast %51 : vector<512xf32> to vector<1x512xf32>
    %53 = arith.mulf %50, %50 : vector<8x512xf32>
    %cst_30 = arith.constant dense<0.000000e+00> : vector<512xf32>
    %54 = vector.multi_reduction <add>, %53, %cst_30 [0] : vector<8x512xf32> to vector<512xf32>
    %55 = vector.shape_cast %54 : vector<512xf32> to vector<1x512xf32>
    %cst_31 = arith.constant 1.250000e-01 : f32
    %56 = vector.broadcast %cst_31 : f32 to vector<1x512xf32>
    %57 = arith.mulf %52, %56 : vector<1x512xf32>
    %cst_32 = arith.constant 1.250000e-01 : f32
    %58 = vector.broadcast %cst_32 : f32 to vector<1x512xf32>
    %59 = arith.mulf %55, %58 : vector<1x512xf32>
    %60 = arith.mulf %57, %57 : vector<1x512xf32>
    %61 = arith.subf %59, %60 : vector<1x512xf32>
    %cst_33 = arith.constant 9.99999974E-6 : f32
    %62 = vector.broadcast %cst_33 : f32 to vector<1x512xf32>
    %63 = arith.addf %61, %62 : vector<1x512xf32>
    %64 = math.rsqrt %63 : vector<1x512xf32>
    %65 = arith.mulf %5, %64 : vector<1x512xf32>
    %66 = arith.mulf %57, %65 : vector<1x512xf32>
    %67 = arith.subf %6, %66 : vector<1x512xf32>
    %68 = vector.broadcast %65 : vector<1x512xf32> to vector<8x512xf32>
    %69 = arith.mulf %50, %68 : vector<8x512xf32>
    %70 = vector.broadcast %67 : vector<1x512xf32> to vector<8x512xf32>
    %71 = arith.addf %69, %70 : vector<8x512xf32>
    %cst_34 = arith.constant 2.000000e-01 : f32
    %72 = vector.broadcast %cst_34 : f32 to vector<8x512xf32>
    %73 = arith.mulf %72, %71 : vector<8x512xf32>
    %74 = arith.maximumf %71, %73 : vector<8x512xf32>
    %75 = arith.truncf %74 : vector<8x512xf32> to vector<8x512xbf16>
    %c0_35 = arith.constant 0 : index
    %c0_36 = arith.constant 0 : index
    %76 = vector.load %arg4[%c0_35, %c0_36] : memref<512x128xbf16, #tpu.memory_space<vmem>>, vector<512x128xbf16>
    %cst_37 = arith.constant dense<0.000000e+00> : vector<8x128xf32>
    %77 = tpu.matmul %75, %76, %cst_37 {dimension_numbers = #tpu.dot_dimension_numbers<[1], [0], [0], [1], [0, 0, 1, 1], [], []>} : vector<8x512xbf16>, vector<512x128xbf16>, vector<8x128xf32> -> vector<8x128xf32>
    %78 = vector.broadcast %7 : vector<1x128xf32> to vector<8x128xf32>
    %79 = arith.addf %77, %78 : vector<8x128xf32>
    %c0_38 = arith.constant 0 : index
    %c0_39 = arith.constant 0 : index
    %80 = vector.load %arg8[%c0_38, %c0_39] : memref<8x128xf32, #tpu.memory_space<vmem>>, vector<8x128xf32>
    tpu.vector_store %arg8[%c0_38, %c0_39], %79 {strides = array<i32>} : memref<8x128xf32, #tpu.memory_space<vmem>>, vector<8x128xf32>,
    return
  }
}

</mosaic_0001>

<llo_original>
// kernel: tpu_custom_call.1
$region0: #{tpu_custom_call.1}
  #allocation0 [shape = 'u32[]', space=smem, size = 0x4, offset = 0x4, fixed_abs, tag = 'smem constant byte address 0x4 - core index']
  #allocation1 [shape = 'u32[72,128]{1,0:T(1,128)}', space=vmem, size = 0x9000, scoped, tag = 'internal scratch']
  %s0 = inlined_call_operand.hbm [shape: f32[8,16], index: 0, kind: input, shape index: {}]
  %s1 = inlined_call_operand.hbm [shape: bf16[16,128], index: 1, kind: input, shape index: {}]
  %s2 = inlined_call_operand.hbm [shape: bf16[128,128], index: 2, kind: input, shape index: {}]
  %s3 = inlined_call_operand.hbm [shape: bf16[128,512], index: 3, kind: input, shape index: {}]
  %s4 = inlined_call_operand.hbm [shape: bf16[512,128], index: 4, kind: input, shape index: {}]
  %s5 = inlined_call_operand.vmem [shape: f32[4,128], index: 5, kind: input, shape index: {}]
  %s6 = inlined_call_operand.hbm [shape: f32[3,512], index: 6, kind: input, shape index: {}]
  %s7 = inlined_call_operand.vmem [shape: f32[1,128], index: 7, kind: input, shape index: {}]
  %s8 = inlined_call_operand.hbm [shape: f32[8,128], index: 8, kind: output, shape index: {}]
  %s9 = sld [smem:[#allocation0]]
  $region66: #{tpu_custom_call.1} parent=0
    _
  %s11 = ssub.s32 1, %s9
  %s12 = scalar_select 0, %s11, %s9
  $region1: #{tpu_custom_call.1} parent=0
    #allocation2 [shape = 'u8[4096]{0}', space=vmem, size = 0x1000, scoped, tag = 'input window, operand 0, single buffered']
    #allocation3 [shape = 's32[1]{0}', space=sflag, size = 0x4, scoped, tag = 'scoped memory for tpu_custom_call.1']
    #allocation4 [shape = 's32[1]{0}', space=sflag, size = 0x4, scoped, tag = 'scoped memory for tpu_custom_call.1']
    #allocation5 [shape = 'u8[4096]{0}', space=vmem, size = 0x1000, scoped, tag = 'input window, operand 1, single buffered']
    #allocation6 [shape = 's32[1]{0}', space=sflag, size = 0x4, scoped, tag = 'scoped memory for tpu_custom_call.1']
    #allocation7 [shape = 'u8[32768]{0}', space=vmem, size = 0x8000, scoped, tag = 'input window, operand 2, single buffered']
    #allocation8 [shape = 'u8[131072]{0}', space=vmem, size = 0x20000, scoped, tag = 'input window, operand 3, single buffered']
    #allocation9 [shape = 's32[1]{0}', space=sflag, size = 0x4, scoped, tag = 'scoped memory for tpu_custom_call.1']
    #allocation10 [shape = 'u8[131072]{0}', space=vmem, size = 0x20000, scoped, tag = 'input window, operand 4, single buffered']
    #allocation11 [shape = 'u8[8192]{0}', space=vmem, size = 0x2000, scoped, tag = 'input window, operand 6, single buffered']
    #allocation12 [shape = 's32[1]{0}', space=sflag, size = 0x4, scoped, tag = 'scoped memory for tpu_custom_call.1']
    #allocation13 [shape = 'u8[4096]{0}', space=vmem, size = 0x1000, scoped, tag = 'output window, operand 0, single buffered']
    %13 = vsyncpa [#allocation3], 0
    %14 = vsyncpa [#allocation6], 0
    %15 = vsyncpa [#allocation9], 0
    %16 = vsyncpa [#allocation12], 0
    %17 = vsyncpa [#allocation4], 0
    // Predicated region
    $region2: #{tpu_custom_call.1} parent=1 // pred_check
      _
    $region3: #{tpu_custom_call.1} parent=1 // pred_check_branch
      %19 = sbr.rel (0) target = $region5
    $region4: #{tpu_custom_call.1} parent=1 // pred_region
      %21 = vsyncadd [#allocation3], 0
      %s23 = sshll.u32 %s0, 4
      %s24 = int_to_ptr.hbm [resolvable:$true] %s23
      %s25 = sshll.u32 [#allocation2], 4
      %s26 = int_to_ptr.vmem [resolvable:$true] %s25
      %28 = dma.hbm_to_vmem [thread:$0]  %s24, 128, %s26, [#allocation3]
    $region5: #{tpu_custom_call.1} parent=1 // pred_fallthru
      _
    // Predicated region
    $region6: #{tpu_custom_call.1} parent=1 // pred_check
      _
    $region7: #{tpu_custom_call.1} parent=1 // pred_check_branch
      %30 = sbr.rel (0) target = $region9
    $region8: #{tpu_custom_call.1} parent=1 // pred_region
      %32 = vsyncadd [#allocation6], 0
      %s33 = sshll.u32 %s1, 4
      %s34 = int_to_ptr.hbm [resolvable:$true] %s33
      %s35 = sshll.u32 [#allocation5], 4
      %s36 = int_to_ptr.vmem [resolvable:$true] %s35
      %41 = dma.hbm_to_vmem [thread:$0]  %s34, 128, %s36, [#allocation6], 64, 64, 4
    $region9: #{tpu_custom_call.1} parent=1 // pred_fallthru
      _
    // Predicated region
    $region10: #{tpu_custom_call.1} parent=1 // pred_check
      _
    $region11: #{tpu_custom_call.1} parent=1 // pred_check_branch
      %43 = sbr.rel (0) target = $region13
    $region12: #{tpu_custom_call.1} parent=1 // pred_region
      %45 = vsyncadd [#allocation6], 0
      %s46 = sshll.u32 %s2, 4
      %s47 = int_to_ptr.hbm [resolvable:$true] %s46
      %s48 = sshll.u32 [#allocation7], 4
      %s49 = int_to_ptr.vmem [resolvable:$true] %s48
      %54 = dma.hbm_to_vmem [thread:$0]  %s47, 1024, %s49, [#allocation6], 64, 64, 4
    $region13: #{tpu_custom_call.1} parent=1 // pred_fallthru
      _
    // Predicated region
    $region14: #{tpu_custom_call.1} parent=1 // pred_check
      _
    $region15: #{tpu_custom_call.1} parent=1 // pred_check_branch
      %56 = sbr.rel (0) target = $region17
    $region16: #{tpu_custom_call.1} parent=1 // pred_region
      %58 = vsyncadd [#allocation9], 0
      %s59 = sshll.u32 %s3, 4
      %s60 = int_to_ptr.hbm [resolvable:$true] %s59
      %s61 = sshll.u32 [#allocation8], 4
      %s62 = int_to_ptr.vmem [resolvable:$true] %s61
      %67 = dma.hbm_to_vmem [thread:$0]  %s60, 4096, %s62, [#allocation9], 256, 256, 16
    $region17: #{tpu_custom_call.1} parent=1 // pred_fallthru
      _
    // Predicated region
    $region18: #{tpu_custom_call.1} parent=1 // pred_check
      _
    $region19: #{tpu_custom_call.1} parent=1 // pred_check_branch
      %69 = sbr.rel (0) target = $region21
    $region20: #{tpu_custom_call.1} parent=1 // pred_region
      %71 = vsyncadd [#allocation9], 0
      %s72 = sshll.u32 %s4, 4
      %s73 = int_to_ptr.hbm [resolvable:$true] %s72
      %s74 = sshll.u32 [#allocation10], 4
      %s75 = int_to_ptr.vmem [resolvable:$true] %s74
      %80 = dma.hbm_to_vmem [thread:$0]  %s73, 4096, %s75, [#allocation9], 64, 64, 4
    $region21: #{tpu_custom_call.1} parent=1 // pred_fallthru
      _
    // Predicated region
    $region22: #{tpu_custom_call.1} parent=1 // pred_check
      _
    $region23: #{tpu_custom_call.1} parent=1 // pred_check_branch
      %82 = sbr.rel (0) target = $region25
    $region24: #{tpu_custom_call.1} parent=1 // pred_region
      _
    $region25: #{tpu_custom_call.1} parent=1 // pred_fallthru
      _
    // Predicated region
    $region26: #{tpu_custom_call.1} parent=1 // pred_check
      _
    $region27: #{tpu_custom_call.1} parent=1 // pred_check_branch
      %84 = sbr.rel (0) target = $region29
    $region28: #{tpu_custom_call.1} parent=1 // pred_region
      %86 = vsyncadd [#allocation12], 0
      %s88 = sshll.u32 %s6, 4
      %s89 = int_to_ptr.hbm [resolvable:$true] %s88
      %s90 = sshll.u32 [#allocation11], 4
      %s91 = int_to_ptr.vmem [resolvable:$true] %s90
      %93 = dma.hbm_to_vmem [thread:$0]  %s89, 256, %s91, [#allocation12]
    $region29: #{tpu_custom_call.1} parent=1 // pred_fallthru
      _
    // Predicated region
    $region30: #{tpu_custom_call.1} parent=1 // pred_check
      _
    $region31: #{tpu_custom_call.1} parent=1 // pred_check_branch
      %95 = sbr.rel (0) target = $region33
    $region32: #{tpu_custom_call.1} parent=1 // pred_region
      _
    $region33: #{tpu_custom_call.1} parent=1 // pred_fallthru
      _
    // Predicated region
    $region34: #{tpu_custom_call.1} parent=1 // pred_check
      _
    $region35: #{tpu_custom_call.1} parent=1 // pred_check_branch
      %97 = sbr.rel (0) target = $region37
    $region36: #{tpu_custom_call.1} parent=1 // pred_region
      %99 = dma.done [#allocation3], 128
    $region37: #{tpu_custom_call.1} parent=1 // pred_fallthru
      _
    // Predicated region
    $region38: #{tpu_custom_call.1} parent=1 // pred_check
      _
    $region39: #{tpu_custom_call.1} parent=1 // pred_check_branch
      %101 = sbr.rel (0) target = $region41
    $region40: #{tpu_custom_call.1} parent=1 // pred_region
      %103 = dma.done [#allocation6], 128
    $region41: #{tpu_custom_call.1} parent=1 // pred_fallthru
      _
    // Predicated region
    $region42: #{tpu_custom_call.1} parent=1 // pred_check
      _
    $region43: #{tpu_custom_call.1} parent=1 // pred_check_branch
      %105 = sbr.rel (0) target = $region45
    $region44: #{tpu_custom_call.1} parent=1 // pred_region
      %107 = dma.done [#allocation6], 1024
    $region45: #{tpu_custom_call.1} parent=1 // pred_fallthru
      _
    // Predicated region
    $region46: #{tpu_custom_call.1} parent=1 // pred_check
      _
    $region47: #{tpu_custom_call.1} parent=1 // pred_check_branch
      %109 = sbr.rel (0) target = $region49
    $region48: #{tpu_custom_call.1} parent=1 // pred_region
      %111 = dma.done [#allocation9], 4096
    $region49: #{tpu_custom_call.1} parent=1 // pred_fallthru
      _
    // Predicated region
    $region50: #{tpu_custom_call.1} parent=1 // pred_check
      _
    $region51: #{tpu_custom_call.1} parent=1 // pred_check_branch
      %113 = sbr.rel (0) target = $region53
    $region52: #{tpu_custom_call.1} parent=1 // pred_region
      %115 = dma.done [#allocation9], 4096
    $region53: #{tpu_custom_call.1} parent=1 // pred_fallthru
      _
    // Predicated region
    $region54: #{tpu_custom_call.1} parent=1 // pred_check
      _
    $region55: #{tpu_custom_call.1} parent=1 // pred_check_branch
      %117 = sbr.rel (0) target = $region57
    $region56: #{tpu_custom_call.1} parent=1 // pred_region
      %119 = dma.done [#allocation12], 256
    $region57: #{tpu_custom_call.1} parent=1 // pred_fallthru
      _
    %v121 = vld [vmem:[%s5] sm:$0x1]
    %v122 = vld [vmem:[%s5 + $0x1] sm:$0x1]
    %v123 = vld [vmem:[%s5 + $0x2] sm:$0x1]
    %v124 = vld [vmem:[%s5 + $0x3] sm:$0x1]
    %v125 = vld [vmem:[#allocation11] ss:$4 sm:$0xf]
    %s126 = scalar_lea.vmem [#allocation11], 1
    %v127 = vld [vmem:[%s126] ss:$4 sm:$0xf]
    %s128 = scalar_lea.vmem [#allocation11], 2
    %v129 = vld [vmem:[%s128] ss:$4 sm:$0xf]
    %v130 = vld [vmem:[%s7] sm:$0x1]
    %v131 = vld [vmem:[#allocation2] sm:$0xff]
    %v132 = vpack.c.bf16 %v131, %v131
    %v133 = vld [vmem:[#allocation5] sm:$0xf]
    %v134 = vld [vmem:[#allocation5 + $0x4] sm:$0xf]
    %v135 = vperm.slane %v121, 0
    %v138 = vunpack.c.l.b16 %v133
    %v139 = vunpack.c.l.b16 %v134
    %v140 = vpack.c.b16 %v139, %v138
    %vm142 = vcmask 130048
    %v144 = vsel %vm142, %v132, 0
    %146 = vmatpush.bf16.msra.mxu0 0
    %147 = vmatpush.bf16.msra.mxu0 0
    %148 = vmatpush.bf16.msra.mxu0 0
    %149 = vmatpush.bf16.msra.mxu0 0
    %150 = vmatpush.bf16.msra.mxu0 0
    %151 = vmatpush.bf16.msra.mxu0 0
    %152 = vmatpush.bf16.msra.mxu0 0
    %153 = vmatpush.bf16.msra.mxu0 %v140
    %154 = vmatmul.bf16.gmra.mxu0 %v144
    %v155 = vpop.f32.mrf.mxu0
    %v156 = vadd.f32 %v135, %v155
    %v157 = vpop.f32.mrf.mxu0
    %158 = vdwg.mxu0
    %v159 = vmul.f32 %v156, 0.2
    %v160 = vmax.f32 %v156, %v159
    %v161 = vpack.c.bf16 %v160, %v160
    %v162 = vld [vmem:[#allocation7] sm:$0xf]
    %v163 = vld [vmem:[#allocation7 + $0x4] sm:$0xf]
    %v164 = vld [vmem:[#allocation7 + $0x8] sm:$0xf]
    %v165 = vld [vmem:[#allocation7 + $0xc] sm:$0xf]
    %v166 = vld [vmem:[#allocation7 + $0x10] sm:$0xf]
    %v167 = vld [vmem:[#allocation7 + $0x14] sm:$0xf]
    %v168 = vld [vmem:[#allocation7 + $0x18] sm:$0xf]
    %v169 = vld [vmem:[#allocation7 + $0x1c] sm:$0xf]
    %v170 = vld [vmem:[#allocation7 + $0x20] sm:$0xf]
    %v171 = vld [vmem:[#allocation7 + $0x24] sm:$0xf]
    %v172 = vld [vmem:[#allocation7 + $0x28] sm:$0xf]
    %v173 = vld [vmem:[#allocation7 + $0x2c] sm:$0xf]
    %v174 = vld [vmem:[#allocation7 + $0x30] sm:$0xf]
    %v175 = vld [vmem:[#allocation7 + $0x34] sm:$0xf]
    %v176 = vld [vmem:[#allocation7 + $0x38] sm:$0xf]
    %v177 = vld [vmem:[#allocation7 + $0x3c] sm:$0xf]
    %v178 = vperm.slane %v122, 0
    %v195 = vunpack.c.l.b16 %v162
    %v196 = vunpack.c.l.b16 %v163
    %v197 = vunpack.c.l.b16 %v164
    %v198 = vunpack.c.l.b16 %v165
    %v199 = vunpack.c.l.b16 %v166
    %v200 = vunpack.c.l.b16 %v167
    %v201 = vunpack.c.l.b16 %v168
    %v202 = vunpack.c.l.b16 %v169
    %v203 = vunpack.c.l.b16 %v170
    %v204 = vunpack.c.l.b16 %v171
    %v205 = vunpack.c.l.b16 %v172
    %v206 = vunpack.c.l.b16 %v173
    %v207 = vunpack.c.l.b16 %v174
    %v208 = vunpack.c.l.b16 %v175
    %v209 = vunpack.c.l.b16 %v176
    %v210 = vunpack.c.l.b16 %v177
    %v211 = vpack.c.b16 %v196, %v195
    %v212 = vpack.c.b16 %v198, %v197
    %v213 = vpack.c.b16 %v200, %v199
    %v214 = vpack.c.b16 %v202, %v201
    %v215 = vpack.c.b16 %v204, %v203
    %v216 = vpack.c.b16 %v206, %v205
    %v217 = vpack.c.b16 %v208, %v207
    %v218 = vpack.c.b16 %v210, %v209
    %227 = vmatpush.bf16.msra.mxu0 %v218
    %228 = vmatpush.bf16.msra.mxu0 %v217
    %229 = vmatpush.bf16.msra.mxu0 %v216
    %230 = vmatpush.bf16.msra.mxu0 %v215
    %231 = vmatpush.bf16.msra.mxu0 %v214
    %232 = vmatpush.bf16.msra.mxu0 %v213
    %233 = vmatpush.bf16.msra.mxu0 %v212
    %234 = vmatpush.bf16.msra.mxu0 %v211
    %235 = vmatmul.bf16.gmra.mxu0 %v161
    %v236 = vpop.f32.mrf.mxu0
    %v237 = vadd.f32 %v178, %v236
    %v238 = vpop.f32.mrf.mxu0
    %239 = vdwg.mxu0
    %v240 = vrot.slane %v237, 4
    %v241 = vadd.f32 %v237, %v240
    %v242 = vrot.slane %v241, 2
    %v243 = vadd.f32 %v241, %v242
    %v244 = vrot.slane %v243, 1
    %v245 = vadd.f32 %v243, %v244
    %v246 = vmul.f32 %v237, %v237
    %v247 = vrot.slane %v246, 4
    %v248 = vadd.f32 %v246, %v247
    %v249 = vrot.slane %v248, 2
    %v250 = vadd.f32 %v248, %v249
    %v251 = vrot.slane %v250, 1
    %v252 = vadd.f32 %v250, %v251
    %v253 = vmul.f32 %v245, 0.125
    %v254 = vmul.f32 %v252, 0.125
    %v255 = vmul.f32 %v253, %v253
    %v256 = vsub.f32 %v254, %v255
    %v257 = vadd.f32 %v256, 1e-05
    %v258 = vrsqrt.pop %v257
    %v259 = vmul.f32 %v258, %v257
    %v260 = vmul.f32 %v259, %v258
    %v261 = vmul.f32 0.5, %v260
    %v262 = vsub.f32 1.5, %v261
    %v263 = vmul.f32 %v258, %v262
    %vm264 = vweird.f32 %v257
    %vm265 = vweird.f32 %v258
    %vm266 = vmor %vm264, %vm265
    %v267 = vsel %vm266, %v258, %v263
    %v268 = vmul.f32 %v123, %v267
    %v269 = vmul.f32 %v253, %v268
    %v270 = vsub.f32 %v124, %v269
    %v271 = vperm.slane %v268, 0
    %v272 = vmul.f32 %v237, %v271
    %v273 = vperm.slane %v270, 0
    %v274 = vadd.f32 %v272, %v273
    %v275 = vmul.f32 %v274, 0.2
    %v276 = vmax.f32 %v274, %v275
    %v277 = vpack.c.bf16 %v276, %v276
    %v278 = vld [vmem:[#allocation8] sm:$0xff]
    %v279 = vld [vmem:[#allocation8 + $0x8] sm:$0xff]
    %v280 = vld [vmem:[#allocation8 + $0x10] sm:$0xff]
    %v281 = vld [vmem:[#allocation8 + $0x18] sm:$0xff]
    %v282 = vld [vmem:[#allocation8 + $0x20] sm:$0xff]
    %v283 = vld [vmem:[#allocation8 + $0x28] sm:$0xff]
    %v284 = vld [vmem:[#allocation8 + $0x30] sm:$0xff]
    %v285 = vld [vmem:[#allocation8 + $0x38] sm:$0xff]
    %v286 = vld [vmem:[#allocation8 + $0x40] sm:$0xff]
    %v287 = vld [vmem:[#allocation8 + $0x48] sm:$0xff]
    %v288 = vld [vmem:[#allocation8 + $0x50] sm:$0xff]
    %v289 = vld [vmem:[#allocation8 + $0x58] sm:$0xff]
    %v290 = vld [vmem:[#allocation8 + $0x60] sm:$0xff]
    %v291 = vld [vmem:[#allocation8 + $0x68] sm:$0xff]
    %v292 = vld [vmem:[#allocation8 + $0x70] sm:$0xff]
    %v293 = vld [vmem:[#allocation8 + $0x78] sm:$0xff]
    %v294 = vld [vmem:[#allocation8 + $0x80] sm:$0xff]
    %v295 = vld [vmem:[#allocation8 + $0x88] sm:$0xff]
    %v296 = vld [vmem:[#allocation8 + $0x90] sm:$0xff]
    %v297 = vld [vmem:[#allocation8 + $0x98] sm:$0xff]
    %v298 = vld [vmem:[#allocation8 + $0xa0] sm:$0xff]
    %v299 = vld [vmem:[#allocation8 + $0xa8] sm:$0xff]
    %v300 = vld [vmem:[#allocation8 + $0xb0] sm:$0xff]
    %v301 = vld [vmem:[#allocation8 + $0xb8] sm:$0xff]
    %v302 = vld [vmem:[#allocation8 + $0xc0] sm:$0xff]
    %v303 = vld [vmem:[#allocation8 + $0xc8] sm:$0xff]
    %v304 = vld [vmem:[#allocation8 + $0xd0] sm:$0xff]
    %v305 = vld [vmem:[#allocation8 + $0xd8] sm:$0xff]
    %v306 = vld [vmem:[#allocation8 + $0xe0] sm:$0xff]
    %v307 = vld [vmem:[#allocation8 + $0xe8] sm:$0xff]
    %v308 = vld [vmem:[#allocation8 + $0xf0] sm:$0xff]
    %v309 = vld [vmem:[#allocation8 + $0xf8] sm:$0xff]
    %v311 = vperm.slane %v125, 0
    %v312 = vperm.slane %v125, 1
    %v313 = vperm.slane %v125, 2
    %v314 = vperm.slane %v125, 3
    %v351 = vunpack.c.l.b16 %v278
    %v352 = vunpack.c.h.b16 %v278
    %v353 = vunpack.c.l.b16 %v279
    %v354 = vunpack.c.h.b16 %v279
    %v355 = vunpack.c.l.b16 %v280
    %v356 = vunpack.c.h.b16 %v280
    %v357 = vunpack.c.l.b16 %v281
    %v358 = vunpack.c.h.b16 %v281
    %v359 = vunpack.c.l.b16 %v282
    %v360 = vunpack.c.h.b16 %v282
    %v361 = vunpack.c.l.b16 %v283
    %v362 = vunpack.c.h.b16 %v283
    %v363 = vunpack.c.l.b16 %v284
    %v364 = vunpack.c.h.b16 %v284
    %v365 = vunpack.c.l.b16 %v285
    %v366 = vunpack.c.h.b16 %v285
    %v367 = vunpack.c.l.b16 %v286
    %v368 = vunpack.c.h.b16 %v286
    %v369 = vunpack.c.l.b16 %v287
    %v370 = vunpack.c.h.b16 %v287
    %v371 = vunpack.c.l.b16 %v288
    %v372 = vunpack.c.h.b16 %v288
    %v373 = vunpack.c.l.b16 %v289
    %v374 = vunpack.c.h.b16 %v289
    %v375 = vunpack.c.l.b16 %v290
    %v376 = vunpack.c.h.b16 %v290
    %v377 = vunpack.c.l.b16 %v291
    %v378 = vunpack.c.h.b16 %v291
    %v379 = vunpack.c.l.b16 %v292
    %v380 = vunpack.c.h.b16 %v292
    %v381 = vunpack.c.l.b16 %v293
    %v382 = vunpack.c.h.b16 %v293
    %v383 = vunpack.c.l.b16 %v294
    %v384 = vunpack.c.h.b16 %v294
    %v385 = vunpack.c.l.b16 %v295
    %v386 = vunpack.c.h.b16 %v295
    %v387 = vunpack.c.l.b16 %v296
    %v388 = vunpack.c.h.b16 %v296
    %v389 = vunpack.c.l.b16 %v297
    %v390 = vunpack.c.h.b16 %v297
    %v391 = vunpack.c.l.b16 %v298
    %v392 = vunpack.c.h.b16 %v298
    %v393 = vunpack.c.l.b16 %v299
    %v394 = vunpack.c.h.b16 %v299
    %v395 = vunpack.c.l.b16 %v300
    %v396 = vunpack.c.h.b16 %v300
    %v397 = vunpack.c.l.b16 %v301
    %v398 = vunpack.c.h.b16 %v301
    %v399 = vunpack.c.l.b16 %v302
    %v400 = vunpack.c.h.b16 %v302
    %v401 = vunpack.c.l.b16 %v303
    %v402 = vunpack.c.h.b16 %v303
    %v403 = vunpack.c.l.b16 %v304
    %v404 = vunpack.c.h.b16 %v304
    %v405 = vunpack.c.l.b16 %v305
    %v406 = vunpack.c.h.b16 %v305
    %v407 = vunpack.c.l.b16 %v306
    %v408 = vunpack.c.h.b16 %v306
    %v409 = vunpack.c.l.b16 %v307
    %v410 = vunpack.c.h.b16 %v307
    %v411 = vunpack.c.l.b16 %v308
    %v412 = vunpack.c.h.b16 %v308
    %v413 = vunpack.c.l.b16 %v309
    %v414 = vunpack.c.h.b16 %v309
    %v415 = vpack.c.b16 %v355, %v351
    %v416 = vpack.c.b16 %v356, %v352
    %v417 = vpack.c.b16 %v357, %v353
    %v418 = vpack.c.b16 %v358, %v354
    %v419 = vpack.c.b16 %v363, %v359
    %v420 = vpack.c.b16 %v364, %v360
    %v421 = vpack.c.b16 %v365, %v361
    %v422 = vpack.c.b16 %v366, %v362
    %v423 = vpack.c.b16 %v371, %v367
    %v424 = vpack.c.b16 %v372, %v368
    %v425 = vpack.c.b16 %v373, %v369
    %v426 = vpack.c.b16 %v374, %v370
    %v427 = vpack.c.b16 %v379, %v375
    %v428 = vpack.c.b16 %v380, %v376
    %v429 = vpack.c.b16 %v381, %v377
    %v430 = vpack.c.b16 %v382, %v378
    %v431 = vpack.c.b16 %v387, %v383
    %v432 = vpack.c.b16 %v388, %v384
    %v433 = vpack.c.b16 %v389, %v385
    %v434 = vpack.c.b16 %v390, %v386
    %v435 = vpack.c.b16 %v395, %v391
    %v436 = vpack.c.b16 %v396, %v392
    %v437 = vpack.c.b16 %v397, %v393
    %v438 = vpack.c.b16 %v398, %v394
    %v439 = vpack.c.b16 %v403, %v399
    %v440 = vpack.c.b16 %v404, %v400
    %v441 = vpack.c.b16 %v405, %v401
    %v442 = vpack.c.b16 %v406, %v402
    %v443 = vpack.c.b16 %v411, %v407
    %v444 = vpack.c.b16 %v412, %v408
    %v445 = vpack.c.b16 %v413, %v409
    %v446 = vpack.c.b16 %v414, %v410
    %479 = vmatpush.bf16.msra.mxu0 %v443
    %480 = vmatpush.bf16.msra.mxu0 %v439
    %481 = vmatpush.bf16.msra.mxu0 %v435
    %482 = vmatpush.bf16.msra.mxu0 %v431
    %483 = vmatpush.bf16.msra.mxu0 %v427
    %484 = vmatpush.bf16.msra.mxu0 %v423
    %485 = vmatpush.bf16.msra.mxu0 %v419
    %486 = vmatpush.bf16.msra.mxu0 %v415
    %487 = vmatmul.bf16.gmra.mxu0 %v277
    %v488 = vpop.f32.mrf.mxu0
    %v489 = vadd.f32 %v311, %v488
    %v490 = vpop.f32.mrf.mxu0
    %491 = vdwg.mxu0
    %492 = vmatpush.bf16.msra.mxu0 %v444
    %493 = vmatpush.bf16.msra.mxu0 %v440
    %494 = vmatpush.bf16.msra.mxu0 %v436
    %495 = vmatpush.bf16.msra.mxu0 %v432
    %496 = vmatpush.bf16.msra.mxu0 %v428
    %497 = vmatpush.bf16.msra.mxu0 %v424
    %498 = vmatpush.bf16.msra.mxu0 %v420
    %499 = vmatpush.bf16.msra.mxu0 %v416
    %500 = vmatmul.bf16.gmra.mxu0 %v277
    %v501 = vpop.f32.mrf.mxu0
    %v502 = vadd.f32 %v312, %v501
    %v503 = vpop.f32.mrf.mxu0
    %504 = vdwg.mxu0
    %505 = vmatpush.bf16.msra.mxu0 %v445
    %506 = vmatpush.bf16.msra.mxu0 %v441
    %507 = vmatpush.bf16.msra.mxu0 %v437
    %508 = vmatpush.bf16.msra.mxu0 %v433
    %509 = vmatpush.bf16.msra.mxu0 %v429
    %510 = vmatpush.bf16.msra.mxu0 %v425
    %511 = vmatpush.bf16.msra.mxu0 %v421
    %512 = vmatpush.bf16.msra.mxu0 %v417
    %513 = vmatmul.bf16.gmra.mxu0 %v277
    %v514 = vpop.f32.mrf.mxu0
    %v515 = vadd.f32 %v313, %v514
    %v516 = vpop.f32.mrf.mxu0
    %517 = vdwg.mxu0
    %518 = vmatpush.bf16.msra.mxu0 %v446
    %519 = vmatpush.bf16.msra.mxu0 %v442
    %520 = vmatpush.bf16.msra.mxu0 %v438
    %521 = vmatpush.bf16.msra.mxu0 %v434
    %522 = vmatpush.bf16.msra.mxu0 %v430
    %523 = vmatpush.bf16.msra.mxu0 %v426
    %524 = vmatpush.bf16.msra.mxu0 %v422
    %525 = vmatpush.bf16.msra.mxu0 %v418
    %526 = vmatmul.bf16.gmra.mxu0 %v277
    %v527 = vpop.f32.mrf.mxu0
    %v528 = vadd.f32 %v314, %v527
    %v529 = vpop.f32.mrf.mxu0
    %530 = vdwg.mxu0
    %v531 = vrot.slane %v489, 4
    %v532 = vadd.f32 %v489, %v531
    %v533 = vrot.slane %v532, 2
    %v534 = vadd.f32 %v532, %v533
    %v535 = vrot.slane %v534, 1
    %v536 = vadd.f32 %v534, %v535
    %v537 = vrot.slane %v502, 4
    %v538 = vadd.f32 %v502, %v537
    %v539 = vrot.slane %v538, 2
    %v540 = vadd.f32 %v538, %v539
    %v541 = vrot.slane %v540, 1
    %v542 = vadd.f32 %v540, %v541
    %v543 = vrot.slane %v515, 4
    %v544 = vadd.f32 %v515, %v543
    %v545 = vrot.slane %v544, 2
    %v546 = vadd.f32 %v544, %v545
    %v547 = vrot.slane %v546, 1
    %v548 = vadd.f32 %v546, %v547
    %v549 = vrot.slane %v528, 4
    %v550 = vadd.f32 %v528, %v549
    %v551 = vrot.slane %v550, 2
    %v552 = vadd.f32 %v550, %v551
    %v553 = vrot.slane %v552, 1
    %v554 = vadd.f32 %v552, %v553
    %v555 = vmul.f32 %v489, %v489
    %v556 = vmul.f32 %v502, %v502
    %v557 = vmul.f32 %v515, %v515
    %v558 = vmul.f32 %v528, %v528
    %v559 = vrot.slane %v555, 4
    %v560 = vadd.f32 %v555, %v559
    %v561 = vrot.slane %v560, 2
    %v562 = vadd.f32 %v560, %v561
    %v563 = vrot.slane %v562, 1
    %v564 = vadd.f32 %v562, %v563
    %v565 = vrot.slane %v556, 4
    %v566 = vadd.f32 %v556, %v565
    %v567 = vrot.slane %v566, 2
    %v568 = vadd.f32 %v566, %v567
    %v569 = vrot.slane %v568, 1
    %v570 = vadd.f32 %v568, %v569
    %v571 = vrot.slane %v557, 4
    %v572 = vadd.f32 %v557, %v571
    %v573 = vrot.slane %v572, 2
    %v574 = vadd.f32 %v572, %v573
    %v575 = vrot.slane %v574, 1
    %v576 = vadd.f32 %v574, %v575
    %v577 = vrot.slane %v558, 4
    %v578 = vadd.f32 %v558, %v577
    %v579 = vrot.slane %v578, 2
    %v580 = vadd.f32 %v578, %v579
    %v581 = vrot.slane %v580, 1
    %v582 = vadd.f32 %v580, %v581
    %v583 = vmul.f32 %v536, 0.125
    %v584 = vmul.f32 %v542, 0.125
    %v585 = vmul.f32 %v548, 0.125
    %v586 = vmul.f32 %v554, 0.125
    %v587 = vmul.f32 %v564, 0.125
    %v588 = vmul.f32 %v570, 0.125
    %v589 = vmul.f32 %v576, 0.125
    %v590 = vmul.f32 %v582, 0.125
    %v591 = vmul.f32 %v583, %v583
    %v592 = vmul.f32 %v584, %v584
    %v593 = vmul.f32 %v585, %v585
    %v594 = vmul.f32 %v586, %v586
    %v595 = vsub.f32 %v587, %v591
    %v596 = vsub.f32 %v588, %v592
    %v597 = vsub.f32 %v589, %v593
    %v598 = vsub.f32 %v590, %v594
    %v599 = vadd.f32 %v595, 1e-05
    %v600 = vadd.f32 %v596, 1e-05
    %v601 = vadd.f32 %v597, 1e-05
    %v602 = vadd.f32 %v598, 1e-05
    %v603 = vrsqrt.pop %v599
    %v604 = vmul.f32 %v603, %v599
    %v605 = vmul.f32 %v604, %v603
    %v606 = vmul.f32 0.5, %v605
    %v607 = vsub.f32 1.5, %v606
    %v608 = vmul.f32 %v603, %v607
    %vm609 = vweird.f32 %v599
    %vm610 = vweird.f32 %v603
    %vm611 = vmor %vm609, %vm610
    %v612 = vsel %vm611, %v603, %v608
    %v613 = vrsqrt.pop %v600
    %v614 = vmul.f32 %v613, %v600
    %v615 = vmul.f32 %v614, %v613
    %v616 = vmul.f32 0.5, %v615
    %v617 = vsub.f32 1.5, %v616
    %v618 = vmul.f32 %v613, %v617
    %vm619 = vweird.f32 %v600
    %vm620 = vweird.f32 %v613
    %vm621 = vmor %vm619, %vm620
    %v622 = vsel %vm621, %v613, %v618
    %v623 = vrsqrt.pop %v601
    %v624 = vmul.f32 %v623, %v601
    %v625 = vmul.f32 %v624, %v623
    %v626 = vmul.f32 0.5, %v625
    %v627 = vsub.f32 1.5, %v626
    %v628 = vmul.f32 %v623, %v627
    %vm629 = vweird.f32 %v601
    %vm630 = vweird.f32 %v623
    %vm631 = vmor %vm629, %vm630
    %v632 = vsel %vm631, %v623, %v628
    %v633 = vrsqrt.pop %v602
    %v634 = vmul.f32 %v633, %v602
    %v635 = vmul.f32 %v634, %v633
    %v636 = vmul.f32 0.5, %v635
    %v637 = vsub.f32 1.5, %v636
    %v638 = vmul.f32 %v633, %v637
    %vm639 = vweird.f32 %v602
    %vm640 = vweird.f32 %v633
    %vm641 = vmor %vm639, %vm640
    %v642 = vsel %vm641, %v633, %v638
    %v647 = vrot.slane %v622, 7
    %v648 = vrot.slane %v632, 6
    %v649 = vrot.slane %v642, 5
    %vm650 = vcmask 1040384
    %v651 = vsel %vm650, %v612, %v647
    %vm652 = vcmask 1042434
    %v653 = vsel %vm652, %v648, %v649
    %vm654 = vcmask 1041408
    %v655 = vsel %vm654, %v651, %v653
    %v657 = vmul.f32 %v127, %v655
    %v659 = vperm.slane %v657, 0
    %v660 = vperm.slane %v657, 1
    %v661 = vperm.slane %v657, 2
    %v662 = vperm.slane %v657, 3
    %v667 = vmul.f32 %v583, %v659
    %v668 = vmul.f32 %v584, %v660
    %v669 = vmul.f32 %v585, %v661
    %v670 = vmul.f32 %v586, %v662
    %v675 = vrot.slane %v668, 7
    %v676 = vrot.slane %v669, 6
    %v677 = vrot.slane %v670, 5
    %v678 = vsel %vm650, %v667, %v675
    %v679 = vsel %vm652, %v676, %v677
    %v680 = vsel %vm654, %v678, %v679
    %v682 = vsub.f32 %v129, %v680
    %v683 = vmul.f32 %v489, %v659
    %v684 = vmul.f32 %v502, %v660
    %v685 = vmul.f32 %v515, %v661
    %v686 = vmul.f32 %v528, %v662
    %v688 = vperm.slane %v682, 0
    %v689 = vperm.slane %v682, 1
    %v690 = vperm.slane %v682, 2
    %v691 = vperm.slane %v682, 3
    %v696 = vadd.f32 %v683, %v688
    %v697 = vadd.f32 %v684, %v689
    %v698 = vadd.f32 %v685, %v690
    %v699 = vadd.f32 %v686, %v691
    %v700 = vmul.f32 %v696, 0.2
    %v701 = vmul.f32 %v697, 0.2
    %v702 = vmul.f32 %v698, 0.2
    %v703 = vmul.f32 %v699, 0.2
    %v704 = vmax.f32 %v696, %v700
    %v705 = vmax.f32 %v697, %v701
    %v706 = vmax.f32 %v698, %v702
    %v707 = vmax.f32 %v699, %v703
    %v708 = vpack.c.bf16 %v704, %v704
    %v709 = vpack.c.bf16 %v705, %v705
    %v710 = vpack.c.bf16 %v706, %v706
    %v711 = vpack.c.bf16 %v707, %v707
    %v712 = vld [vmem:[#allocation10] sm:$0xf]
    %v713 = vld [vmem:[#allocation10 + $0x4] sm:$0xf]
    %v714 = vld [vmem:[#allocation10 + $0x8] sm:$0xf]
    %v715 = vld [vmem:[#allocation10 + $0xc] sm:$0xf]
    %v716 = vld [vmem:[#allocation10 + $0x10] sm:$0xf]
    %v717 = vld [vmem:[#allocation10 + $0x14] sm:$0xf]
    %v718 = vld [vmem:[#allocation10 + $0x18] sm:$0xf]
    %v719 = vld [vmem:[#allocation10 + $0x1c] sm:$0xf]
    %v720 = vld [vmem:[#allocation10 + $0x20] sm:$0xf]
    %v721 = vld [vmem:[#allocation10 + $0x24] sm:$0xf]
    %v722 = vld [vmem:[#allocation10 + $0x28] sm:$0xf]
    %v723 = vld [vmem:[#allocation10 + $0x2c] sm:$0xf]
    %v724 = vld [vmem:[#allocation10 + $0x30] sm:$0xf]
    %v725 = vld [vmem:[#allocation10 + $0x34] sm:$0xf]
    %v726 = vld [vmem:[#allocation10 + $0x38] sm:$0xf]
    %v727 = vld [vmem:[#allocation10 + $0x3c] sm:$0xf]
    %v728 = vld [vmem:[#allocation10 + $0x40] sm:$0xf]
    %v729 = vld [vmem:[#allocation10 + $0x44] sm:$0xf]
    %v730 = vld [vmem:[#allocation10 + $0x48] sm:$0xf]
    %v731 = vld [vmem:[#allocation10 + $0x4c] sm:$0xf]
    %v732 = vld [vmem:[#allocation10 + $0x50] sm:$0xf]
    %v733 = vld [vmem:[#allocation10 + $0x54] sm:$0xf]
    %v734 = vld [vmem:[#allocation10 + $0x58] sm:$0xf]
    %v735 = vld [vmem:[#allocation10 + $0x5c] sm:$0xf]
    %v736 = vld [vmem:[#allocation10 + $0x60] sm:$0xf]
    %v737 = vld [vmem:[#allocation10 + $0x64] sm:$0xf]
    %v738 = vld [vmem:[#allocation10 + $0x68] sm:$0xf]
    %v739 = vld [vmem:[#allocation10 + $0x6c] sm:$0xf]
    %v740 = vld [vmem:[#allocation10 + $0x70] sm:$0xf]
    %v741 = vld [vmem:[#allocation10 + $0x74] sm:$0xf]
    %v742 = vld [vmem:[#allocation10 + $0x78] sm:$0xf]
    %v743 = vld [vmem:[#allocation10 + $0x7c] sm:$0xf]
    %v744 = vld [vmem:[#allocation10 + $0x80] sm:$0xf]
    %v745 = vld [vmem:[#allocation10 + $0x84] sm:$0xf]
    %v746 = vld [vmem:[#allocation10 + $0x88] sm:$0xf]
    %v747 = vld [vmem:[#allocation10 + $0x8c] sm:$0xf]
    %v748 = vld [vmem:[#allocation10 + $0x90] sm:$0xf]
    %v749 = vld [vmem:[#allocation10 + $0x94] sm:$0xf]
    %v750 = vld [vmem:[#allocation10 + $0x98] sm:$0xf]
    %v751 = vld [vmem:[#allocation10 + $0x9c] sm:$0xf]
    %v752 = vld [vmem:[#allocation10 + $0xa0] sm:$0xf]
    %v753 = vld [vmem:[#allocation10 + $0xa4] sm:$0xf]
    %v754 = vld [vmem:[#allocation10 + $0xa8] sm:$0xf]
    %v755 = vld [vmem:[#allocation10 + $0xac] sm:$0xf]
    %v756 = vld [vmem:[#allocation10 + $0xb0] sm:$0xf]
    %v757 = vld [vmem:[#allocation10 + $0xb4] sm:$0xf]
    %v758 = vld [vmem:[#allocation10 + $0xb8] sm:$0xf]
    %v759 = vld [vmem:[#allocation10 + $0xbc] sm:$0xf]
    %v760 = vld [vmem:[#allocation10 + $0xc0] sm:$0xf]
    %v761 = vld [vmem:[#allocation10 + $0xc4] sm:$0xf]
    %v762 = vld [vmem:[#allocation10 + $0xc8] sm:$0xf]
    %v763 = vld [vmem:[#allocation10 + $0xcc] sm:$0xf]
    %v764 = vld [vmem:[#allocation10 + $0xd0] sm:$0xf]
    %v765 = vld [vmem:[#allocation10 + $0xd4] sm:$0xf]
    %v766 = vld [vmem:[#allocation10 + $0xd8] sm:$0xf]
    %v767 = vld [vmem:[#allocation10 + $0xdc] sm:$0xf]
    %v768 = vld [vmem:[#allocation10 + $0xe0] sm:$0xf]
    %v769 = vld [vmem:[#allocation10 + $0xe4] sm:$0xf]
    %v770 = vld [vmem:[#allocation10 + $0xe8] sm:$0xf]
    %v771 = vld [vmem:[#allocation10 + $0xec] sm:$0xf]
    %v772 = vld [vmem:[#allocation10 + $0xf0] sm:$0xf]
    %v773 = vld [vmem:[#allocation10 + $0xf4] sm:$0xf]
    %v774 = vld [vmem:[#allocation10 + $0xf8] sm:$0xf]
    %v775 = vld [vmem:[#allocation10 + $0xfc] sm:$0xf]
    %v777 = vperm.slane %v130, 0
    %v843 = vunpack.c.l.b16 %v712
    %v844 = vunpack.c.l.b16 %v713
    %v845 = vunpack.c.l.b16 %v714
    %v846 = vunpack.c.l.b16 %v715
    %v847 = vunpack.c.l.b16 %v716
    %v848 = vunpack.c.l.b16 %v717
    %v849 = vunpack.c.l.b16 %v718
    %v850 = vunpack.c.l.b16 %v719
    %v851 = vunpack.c.l.b16 %v720
    %v852 = vunpack.c.l.b16 %v721
    %v853 = vunpack.c.l.b16 %v722
    %v854 = vunpack.c.l.b16 %v723
    %v855 = vunpack.c.l.b16 %v724
    %v856 = vunpack.c.l.b16 %v725
    %v857 = vunpack.c.l.b16 %v726
    %v858 = vunpack.c.l.b16 %v727
    %v859 = vunpack.c.l.b16 %v728
    %v860 = vunpack.c.l.b16 %v729
    %v861 = vunpack.c.l.b16 %v730
    %v862 = vunpack.c.l.b16 %v731
    %v863 = vunpack.c.l.b16 %v732
    %v864 = vunpack.c.l.b16 %v733
    %v865 = vunpack.c.l.b16 %v734
    %v866 = vunpack.c.l.b16 %v735
    %v867 = vunpack.c.l.b16 %v736
    %v868 = vunpack.c.l.b16 %v737
    %v869 = vunpack.c.l.b16 %v738
    %v870 = vunpack.c.l.b16 %v739
    %v871 = vunpack.c.l.b16 %v740
    %v872 = vunpack.c.l.b16 %v741
    %v873 = vunpack.c.l.b16 %v742
    %v874 = vunpack.c.l.b16 %v743
    %v875 = vunpack.c.l.b16 %v744
    %v876 = vunpack.c.l.b16 %v745
    %v877 = vunpack.c.l.b16 %v746
    %v878 = vunpack.c.l.b16 %v747
    %v879 = vunpack.c.l.b16 %v748
    %v880 = vunpack.c.l.b16 %v749
    %v881 = vunpack.c.l.b16 %v750
    %v882 = vunpack.c.l.b16 %v751
    %v883 = vunpack.c.l.b16 %v752
    %v884 = vunpack.c.l.b16 %v753
    %v885 = vunpack.c.l.b16 %v754
    %v886 = vunpack.c.l.b16 %v755
    %v887 = vunpack.c.l.b16 %v756
    %v888 = vunpack.c.l.b16 %v757
    %v889 = vunpack.c.l.b16 %v758
    %v890 = vunpack.c.l.b16 %v759
    %v891 = vunpack.c.l.b16 %v760
    %v892 = vunpack.c.l.b16 %v761
    %v893 = vunpack.c.l.b16 %v762
    %v894 = vunpack.c.l.b16 %v763
    %v895 = vunpack.c.l.b16 %v764
    %v896 = vunpack.c.l.b16 %v765
    %v897 = vunpack.c.l.b16 %v766
    %v898 = vunpack.c.l.b16 %v767
    %v899 = vunpack.c.l.b16 %v768
    %v900 = vunpack.c.l.b16 %v769
    %v901 = vunpack.c.l.b16 %v770
    %v902 = vunpack.c.l.b16 %v771
    %v903 = vunpack.c.l.b16 %v772
    %v904 = vunpack.c.l.b16 %v773
    %v905 = vunpack.c.l.b16 %v774
    %v906 = vunpack.c.l.b16 %v775
    %v907 = vpack.c.b16 %v844, %v843
    %v908 = vpack.c.b16 %v846, %v845
    %v909 = vpack.c.b16 %v848, %v847
    %v910 = vpack.c.b16 %v850, %v849
    %v911 = vpack.c.b16 %v852, %v851
    %v912 = vpack.c.b16 %v854, %v853
    %v913 = vpack.c.b16 %v856, %v855
    %v914 = vpack.c.b16 %v858, %v857
    %v915 = vpack.c.b16 %v860, %v859
    %v916 = vpack.c.b16 %v862, %v861
    %v917 = vpack.c.b16 %v864, %v863
    %v918 = vpack.c.b16 %v866, %v865
    %v919 = vpack.c.b16 %v868, %v867
    %v920 = vpack.c.b16 %v870, %v869
    %v921 = vpack.c.b16 %v872, %v871
    %v922 = vpack.c.b16 %v874, %v873
    %v923 = vpack.c.b16 %v876, %v875
    %v924 = vpack.c.b16 %v878, %v877
    %v925 = vpack.c.b16 %v880, %v879
    %v926 = vpack.c.b16 %v882, %v881
    %v927 = vpack.c.b16 %v884, %v883
    %v928 = vpack.c.b16 %v886, %v885
    %v929 = vpack.c.b16 %v888, %v887
    %v930 = vpack.c.b16 %v890, %v889
    %v931 = vpack.c.b16 %v892, %v891
    %v932 = vpack.c.b16 %v894, %v893
    %v933 = vpack.c.b16 %v896, %v895
    %v934 = vpack.c.b16 %v898, %v897
    %v935 = vpack.c.b16 %v900, %v899
    %v936 = vpack.c.b16 %v902, %v901
    %v937 = vpack.c.b16 %v904, %v903
    %v938 = vpack.c.b16 %v906, %v905
    %971 = vmatpush.bf16.msra.mxu0 %v914
    %972 = vmatpush.bf16.msra.mxu0 %v913
    %973 = vmatpush.bf16.msra.mxu0 %v912
    %974 = vmatpush.bf16.msra.mxu0 %v911
    %975 = vmatpush.bf16.msra.mxu0 %v910
    %976 = vmatpush.bf16.msra.mxu0 %v909
    %977 = vmatpush.bf16.msra.mxu0 %v908
    %978 = vmatpush.bf16.msra.mxu0 %v907
    %979 = vmatmul.bf16.gmra.mxu0 %v708
    %v980 = vpop.f32.mrf.mxu0
    %v981 = vadd.f32 %v777, %v980
    %v982 = vpop.f32.mrf.mxu0
    %983 = vdwg.mxu0
    %984 = vmatpush.bf16.msra.mxu0 %v922
    %985 = vmatpush.bf16.msra.mxu0 %v921
    %986 = vmatpush.bf16.msra.mxu0 %v920
    %987 = vmatpush.bf16.msra.mxu0 %v919
    %988 = vmatpush.bf16.msra.mxu0 %v918
    %989 = vmatpush.bf16.msra.mxu0 %v917
    %990 = vmatpush.bf16.msra.mxu0 %v916
    %991 = vmatpush.bf16.msra.mxu0 %v915
    %992 = vmatmul.bf16.gmra.mxu0 %v709
    %v993 = vpop.f32.mrf.mxu0
    %v994 = vadd.f32 %v981, %v993
    %v995 = vpop.f32.mrf.mxu0
    %996 = vdwg.mxu0
    %997 = vmatpush.bf16.msra.mxu0 %v930
    %998 = vmatpush.bf16.msra.mxu0 %v929
    %999 = vmatpush.bf16.msra.mxu0 %v928
    %1000 = vmatpush.bf16.msra.mxu0 %v927
    %1001 = vmatpush.bf16.msra.mxu0 %v926
    %1002 = vmatpush.bf16.msra.mxu0 %v925
    %1003 = vmatpush.bf16.msra.mxu0 %v924
    %1004 = vmatpush.bf16.msra.mxu0 %v923
    %1005 = vmatmul.bf16.gmra.mxu0 %v710
    %v1006 = vpop.f32.mrf.mxu0
    %v1007 = vadd.f32 %v994, %v1006
    %v1008 = vpop.f32.mrf.mxu0
    %1009 = vdwg.mxu0
    %1010 = vmatpush.bf16.msra.mxu0 %v938
    %1011 = vmatpush.bf16.msra.mxu0 %v937
    %1012 = vmatpush.bf16.msra.mxu0 %v936
    %1013 = vmatpush.bf16.msra.mxu0 %v935
    %1014 = vmatpush.bf16.msra.mxu0 %v934
    %1015 = vmatpush.bf16.msra.mxu0 %v933
    %1016 = vmatpush.bf16.msra.mxu0 %v932
    %1017 = vmatpush.bf16.msra.mxu0 %v931
    %1018 = vmatmul.bf16.gmra.mxu0 %v711
    %v1019 = vpop.f32.mrf.mxu0
    %v1020 = vadd.f32 %v1007, %v1019
    %v1021 = vpop.f32.mrf.mxu0
    %1022 = vdwg.mxu0
    %1023 = vst [vmem:[#allocation13] sm:$0xff] %v1020
    // Predicated region
    $region58: #{tpu_custom_call.1} parent=1 // pred_check
      _
    $region59: #{tpu_custom_call.1} parent=1 // pred_check_branch
      %1025 = sbr.rel (0) target = $region61
    $region60: #{tpu_custom_call.1} parent=1 // pred_region
      %1027 = vsyncadd [#allocation4], 0
      %s1029 = sshll.u32 [#allocation13], 4
      %s1030 = int_to_ptr.vmem [resolvable:$true] %s1029
      %s1031 = sshll.u32 %s8, 4
      %s1032 = int_to_ptr.hbm [resolvable:$true] %s1031
      %1034 = dma.vmem_to_hbm [thread:$0]  %s1030, 128, %s1032, [#allocation4]
    $region61: #{tpu_custom_call.1} parent=1 // pred_fallthru
      _
    // Predicated region
    $region62: #{tpu_custom_call.1} parent=1 // pred_check
      _
    $region63: #{tpu_custom_call.1} parent=1 // pred_check_branch
      %1036 = sbr.rel (0) target = $region65
    $region64: #{tpu_custom_call.1} parent=1 // pred_region
      %1038 = dma.done [#allocation4], 128
    $region65: #{tpu_custom_call.1} parent=1 // pred_fallthru
      _
    %1039 = vsyncpa [#allocation3], 1
    %1040 = vsyncpa [#allocation6], 1
    %1041 = vsyncpa [#allocation9], 1
    %1042 = vsyncpa [#allocation12], 1
    %1043 = vsyncpa [#allocation4], 1

</llo_original>
